<compile_context>
chip_gen: v6e
topology: v6e:2x2x1
jax: 0.10.0
libtpu: 0.0.40
codegen_flags: <defaults>
</compile_context>

<pallas_src>
import functools

import jax
import jax.numpy as jnp
from jax.experimental import pallas as pl
from jax.experimental.pallas import tpu as pltpu


def _round_up(x: int, m: int) -> int:
    return ((x + m - 1) // m) * m


def _vmem_cap_bytes() -> int:
    """Per-core VMEM capacity minus headroom, queried from the hardware."""
    try:
        cap = int(pltpu.get_tpu_info().vmem_capacity_bytes)
    except Exception:
        cap = 64 << 20  # conservative fallback (v7x per-TC VMEM)
    return max(cap - (8 << 20), 16 << 20)


def _choose_tile_b(B: int, sublane: int = 16) -> int:
    """Sublane-aligned batch tile. >=2 grid steps once B >= 256 (v7x has 2 TCs);
    256-row M tiles for large batches (MXU-sized, modest last-tile padding)."""
    Bp = _round_up(B, sublane)
    if Bp < 256:
        return Bp                                   # single step; too small to split
    if Bp < 512:
        return _round_up((Bp + 1) // 2, sublane)    # 2 steps -> both TCs busy
    return 256


# --------------------------------------------------------------------------- #
# Fused path: all three matmuls + bias + ReLU in one kernel, weights resident. #
# --------------------------------------------------------------------------- #
def _fused_fpn_kernel(fp_ref, w1_ref, b1_ref, w2_ref, b2_ref, w3_ref, b3_ref, out_ref):
    # hidden = relu(fp @ W1 + b1): MXU matmul (bf16/f32 in, f32 accumulate),
    # bias + ReLU on the VPU in f32.
    h = jnp.dot(fp_ref[...], w1_ref[...], preferred_element_type=jnp.float32)
    h = jnp.maximum(h + b1_ref[...], 0.0)
    # mid = relu(h @ W2 + b2)
    m = jnp.dot(h.astype(w2_ref.dtype), w2_ref[...], preferred_element_type=jnp.float32)
    m = jnp.maximum(m + b2_ref[...], 0.0)
    # out = m @ W3 + b3  (no activation, matches the module)
    o = jnp.dot(m.astype(w3_ref.dtype), w3_ref[...], preferred_element_type=jnp.float32)
    out_ref[...] = (o + b3_ref[...]).astype(out_ref.dtype)


# --------------------------------------------------------------------------- #
# Fallback path: one tiled linear (+optional ReLU) per layer.                  #
# --------------------------------------------------------------------------- #
def _linear_kernel(x_ref, w_ref, b_ref, o_ref, acc_ref, *, relu):
    @pl.when(pl.program_id(2) == 0)
    def _init():
        acc_ref[...] = jnp.zeros_like(acc_ref)

    acc_ref[...] += jnp.dot(x_ref[...], w_ref[...], preferred_element_type=jnp.float32)

    @pl.when(pl.program_id(2) == pl.num_programs(2) - 1)
    def _finalize():
        y = acc_ref[...] + b_ref[...]
        if relu:
            y = jnp.maximum(y, 0.0)
        o_ref[...] = y.astype(o_ref.dtype)


def _tiled_linear(x, w, b, *, relu, out_dtype, tm, vmem_limit):
    Bp, Kp = x.shape
    _, Np = w.shape
    tk = 256 if Kp % 256 == 0 else 128
    tn = 256 if Np % 256 == 0 else 128
    grid = (Bp // tm, Np // tn, Kp // tk)
    return pl.pallas_call(
        functools.partial(_linear_kernel, relu=relu),
        out_shape=jax.ShapeDtypeStruct((Bp, Np), out_dtype),
        grid_spec=pltpu.PrefetchScalarGridSpec(
            num_scalar_prefetch=0,
            grid=grid,
            in_specs=[
                pl.BlockSpec((tm, tk), lambda i, j, k: (i, k)),
                pl.BlockSpec((tk, tn), lambda i, j, k: (k, j)),
                pl.BlockSpec((1, tn), lambda i, j, k: (0, j)),
            ],
            out_specs=pl.BlockSpec((tm, tn), lambda i, j, k: (i, j)),
            scratch_shapes=[pltpu.VMEM((tm, tn), jnp.float32)],
        ),
        compiler_params=pltpu.CompilerParams(
            dimension_semantics=("parallel", "parallel", "arbitrary"),
            vmem_limit_bytes=vmem_limit,
        ),
    )(x, w, b)


# --------------------------------------------------------------------------- #
# One-time parameter prep (hoisted out of the per-call path).                  #
# --------------------------------------------------------------------------- #
def prepare_fpn_params(w1, b1, w2, b2, w3, b3, *, use_bf16=True):
    """Zero-pad every feature dim to a multiple of 128 (lane-dense, numerically
    exact: relu(0+0)=0 and zero rows/cols contribute nothing) and cast weights
    to the MXU matmul dtype. Biases stay f32 (the elementwise tail is f32)."""
    C, H = w1.shape
    _, M = w2.shape
    _, O = w3.shape
    Cp, Hp, Mp, Op = (_round_up(d, 128) for d in (C, H, M, O))
    mat_dtype = jnp.bfloat16 if use_bf16 else jnp.float32
    f32 = jnp.float32
    w1_p = jnp.pad(w1.astype(mat_dtype), ((0, Cp - C), (0, Hp - H)))
    w2_p = jnp.pad(w2.astype(mat_dtype), ((0, Hp - H), (0, Mp - M)))
    w3_p = jnp.pad(w3.astype(mat_dtype), ((0, Mp - M), (0, Op - O)))
    b1_p = jnp.pad(b1.astype(f32).reshape(1, H), ((0, 0), (0, Hp - H)))
    b2_p = jnp.pad(b2.astype(f32).reshape(1, M), ((0, 0), (0, Mp - M)))
    b3_p = jnp.pad(b3.astype(f32).reshape(1, O), ((0, 0), (0, Op - O)))
    return {
        "weights": (w1_p, b1_p, w2_p, b2_p, w3_p, b3_p),
        "in_features": C,
        "out_features": O,
    }


# --------------------------------------------------------------------------- #
# Forward                                                                      #
# --------------------------------------------------------------------------- #
def fpn_forward(fp, params, *, force_tiled=False):
    w1_p, b1_p, w2_p, b2_p, w3_p, b3_p = params["weights"]
    return _fpn_forward_impl(
        fp, w1_p, b1_p, w2_p, b2_p, w3_p, b3_p,
        out_features=params["out_features"], force_tiled=force_tiled,
    )


@functools.partial(jax.jit, static_argnames=("out_features", "force_tiled"))
def _fpn_forward_impl(fp, w1_p, b1_p, w2_p, b2_p, w3_p, b3_p, *,
                      out_features, force_tiled):
    B, C_in = fp.shape
    Cp, Hp = w1_p.shape
    Mp = w2_p.shape[1]
    Op = w3_p.shape[1]
    mat_dtype = w1_p.dtype
    out_dtype = fp.dtype
    mat_bytes = jnp.dtype(mat_dtype).itemsize
    out_bytes = jnp.dtype(out_dtype).itemsize

    tile_b = _choose_tile_b(B)
    Bp = _round_up(B, tile_b)

    # Generation-aware VMEM budget; always passed explicitly.
    cap = _vmem_cap_bytes()
    resident_bytes = (Cp * Hp + Hp * Mp + Mp * Op) * mat_bytes + (Hp + Mp + Op) * 4
    vmem_est = (
        2 * tile_b * Cp * mat_bytes           # double-buffered input tiles
        + 2 * tile_b * Op * out_bytes         # double-buffered output tiles
        + resident_bytes                      # single-buffer resident weights/biases
        + 3 * tile_b * max(Hp, Mp, Op) * 4    # live f32 intermediates headroom
    )
    vmem_limit = int(min(cap, max(2 * vmem_est, 32 << 20)))

    # Activations: cast first (bf16 halves the pad/DMA bytes) then zero-pad;
    # both are skipped entirely when they would be no-ops.
    x = fp if fp.dtype == mat_dtype else fp.astype(mat_dtype)
    if Bp != B or Cp != C_in:
        x = jnp.pad(x, ((0, Bp - B), (0, Cp - C_in)))

    use_fused = (not force_tiled) and (resident_bytes <= cap // 3)
    if use_fused:
        resident = pl.BlockSpec(memory_space=pltpu.MemorySpace.VMEM)
        out_padded = pl.pallas_call(
            _fused_fpn_kernel,
            out_shape=jax.ShapeDtypeStruct((Bp, Op), out_dtype),
            grid_spec=pltpu.PrefetchScalarGridSpec(
                num_scalar_prefetch=0,
                grid=(Bp // tile_b,),
                in_specs=[
                    pl.BlockSpec((tile_b, Cp), lambda i: (i, 0)),  # fp tile (lane-dense)
                    resident, resident,                            # W1, b1
                    resident, resident,                            # W2, b2
                    resident, resident,                            # W3, b3
                ],
                out_specs=pl.BlockSpec((tile_b, Op), lambda i: (i, 0)),
            ),
            compiler_params=pltpu.CompilerParams(
                dimension_semantics=("parallel",),
                vmem_limit_bytes=vmem_limit,
            ),
        )(x, w1_p, b1_p, w2_p, b2_p, w3_p, b3_p)
    else:
        # Weights too large to keep VMEM-resident: stream them block-by-block.
        vmem_limit_t = int(min(cap, 32 << 20))
        h = _tiled_linear(x, w1_p, b1_p, relu=True, out_dtype=mat_dtype,
                          tm=tile_b, vmem_limit=vmem_limit_t)
        m = _tiled_linear(h, w2_p, b2_p, relu=True, out_dtype=mat_dtype,
                          tm=tile_b, vmem_limit=vmem_limit_t)
        out_padded = _tiled_linear(m, w3_p, b3_p, relu=False, out_dtype=out_dtype,
                                   tm=tile_b, vmem_limit=vmem_limit_t)

    if Bp == B and Op == out_features:
        return out_padded                      # no extra HBM slice pass
    return out_padded[:B, :out_features]


def fpn_reference(fp, w1, b1, w2, b2, w3, b3):
    h = jnp.maximum(fp @ w1 + b1, 0.0)
    m = jnp.maximum(h @ w2 + b2, 0.0)
    return m @ w3 + b3


if __name__ == "__main__":
    # Shapes implied by FPN(in_channals, hidden_channals, mid_channals, out_channals, drop_p)
    B = 16
    in_channals, hidden_channals, mid_channals, out_channals = 32, 64, 48, 16

    key = jax.random.PRNGKey(0)
    k_fp, k_w1, k_b1, k_w2, k_b2, k_w3, k_b3 = jax.random.split(key, 7)

    fp = jax.random.normal(k_fp, (B, in_channals), jnp.float32)
    # Parameters stored as [in, out] (nn.Linear weight transposed) so y = x @ W + b.
    w1 = jax.random.normal(k_w1, (in_channals, hidden_channals), jnp.float32) * 0.1
    b1 = jax.random.normal(k_b1, (hidden_channals,), jnp.float32) * 0.1
    w2 = jax.random.normal(k_w2, (hidden_channals, mid_channals), jnp.float32) * 0.1
    b2 = jax.random.normal(k_b2, (mid_channals,), jnp.float32) * 0.1
    w3 = jax.random.normal(k_w3, (mid_channals, out_channals), jnp.float32) * 0.1
    b3 = jax.random.normal(k_b3, (out_channals,), jnp.float32) * 0.1

    ref = fpn_reference(fp, w1, b1, w2, b2, w3, b3)

    # One-time parameter prep (padding / bf16 cast hoisted out of the per-call path).
    params_bf16 = prepare_fpn_params(w1, b1, w2, b2, w3, b3, use_bf16=True)
    params_f32 = prepare_fpn_params(w1, b1, w2, b2, w3, b3, use_bf16=False)

    # Fused kernel, bf16 MXU inputs (f32 accumulate/bias/ReLU).
    out_bf16 = jax.block_until_ready(fpn_forward(fp, params_bf16))
    assert out_bf16.shape == (B, out_channals)
    assert out_bf16.dtype == fp.dtype
    assert jnp.allclose(out_bf16, ref, atol=2e-2, rtol=2e-2), \
        "bf16 Pallas output mismatch vs reference"

    # Fused kernel, full-f32 path matches tightly.
    out_f32 = jax.block_until_ready(fpn_forward(fp, params_f32))
    assert jnp.allclose(out_f32, ref, atol=1e-4, rtol=1e-4), \
        "f32 Pallas output mismatch vs reference"

    # Exercise the K/N-tiled fallback (used when resident weights would not fit VMEM).
    out_tiled = jax.block_until_ready(fpn_forward(fp, params_f32, force_tiled=True))
    assert jnp.allclose(out_tiled, ref, atol=1e-4, rtol=1e-4), \
        "tiled-fallback Pallas output mismatch vs reference"

    print("KERNEL_OK")
</pallas_src>

<mosaic_0001>
module attributes {stable_mosaic.version = 11 : i64} {
  func.func @_fused_fpn_kernel(%arg0: i32, %arg1: memref<16x128xbf16, #tpu.memory_space<vmem>>, %arg2: memref<128x128xbf16, #tpu.memory_space<vmem>>, %arg3: memref<1x128xf32, #tpu.memory_space<vmem>>, %arg4: memref<128x128xbf16, #tpu.memory_space<vmem>>, %arg5: memref<1x128xf32, #tpu.memory_space<vmem>>, %arg6: memref<128x128xbf16, #tpu.memory_space<vmem>>, %arg7: memref<1x128xf32, #tpu.memory_space<vmem>>, %arg8: memref<16x128xf32, #tpu.memory_space<vmem>>) attributes {dimension_semantics = [#tpu.dimension_semantics<parallel>], iteration_bounds = array<i64: 1>, scalar_prefetch = 0 : i64, scratch_operands = 0 : i64, tpu.core_type = #tpu.core_type<tc>, window_params = [{transform_indices = @transform_0, window_bounds = array<i64: 16, 128>}, {pipeline_mode = #tpu.pipeline_mode<synchronous>, transform_indices = @transform_1, window_bounds = array<i64: 128, 128>}, {pipeline_mode = #tpu.pipeline_mode<synchronous>, transform_indices = @transform_2, window_bounds = array<i64: 1, 128>}, {pipeline_mode = #tpu.pipeline_mode<synchronous>, transform_indices = @transform_3, window_bounds = array<i64: 128, 128>}, {pipeline_mode = #tpu.pipeline_mode<synchronous>, transform_indices = @transform_4, window_bounds = array<i64: 1, 128>}, {pipeline_mode = #tpu.pipeline_mode<synchronous>, transform_indices = @transform_5, window_bounds = array<i64: 128, 128>}, {pipeline_mode = #tpu.pipeline_mode<synchronous>, transform_indices = @transform_6, window_bounds = array<i64: 1, 128>}, {transform_indices = @transform_7, window_bounds = array<i64: 16, 128>}]} {
    %c0 = arith.constant 0 : index
    %c0_0 = arith.constant 0 : index
    %0 = vector.load %arg1[%c0, %c0_0] : memref<16x128xbf16, #tpu.memory_space<vmem>>, vector<16x128xbf16>
    %c0_1 = arith.constant 0 : index
    %c0_2 = arith.constant 0 : index
    %1 = vector.load %arg2[%c0_1, %c0_2] : memref<128x128xbf16, #tpu.memory_space<vmem>>, vector<128x128xbf16>
    %cst = arith.constant dense<0.000000e+00> : vector<16x128xf32>
    %2 = tpu.matmul %0, %1, %cst {dimension_numbers = #tpu.dot_dimension_numbers<[1], [0], [0], [1], [0, 0, 1, 1], [], []>} : vector<16x128xbf16>, vector<128x128xbf16>, vector<16x128xf32> -> vector<16x128xf32>
    %c0_3 = arith.constant 0 : index
    %c0_4 = arith.constant 0 : index
    %3 = vector.load %arg3[%c0_3, %c0_4] : memref<1x128xf32, #tpu.memory_space<vmem>>, vector<1x128xf32>
    %4 = vector.broadcast %3 : vector<1x128xf32> to vector<16x128xf32>
    %5 = arith.addf %2, %4 : vector<16x128xf32>
    %cst_5 = arith.constant 0.000000e+00 : f32
    %6 = vector.broadcast %cst_5 : f32 to vector<16x128xf32>
    %7 = arith.maximumf %5, %6 : vector<16x128xf32>
    %8 = arith.truncf %7 : vector<16x128xf32> to vector<16x128xbf16>
    %c0_6 = arith.constant 0 : index
    %c0_7 = arith.constant 0 : index
    %9 = vector.load %arg4[%c0_6, %c0_7] : memref<128x128xbf16, #tpu.memory_space<vmem>>, vector<128x128xbf16>
    %cst_8 = arith.constant dense<0.000000e+00> : vector<16x128xf32>
    %10 = tpu.matmul %8, %9, %cst_8 {dimension_numbers = #tpu.dot_dimension_numbers<[1], [0], [0], [1], [0, 0, 1, 1], [], []>} : vector<16x128xbf16>, vector<128x128xbf16>, vector<16x128xf32> -> vector<16x128xf32>
    %c0_9 = arith.constant 0 : index
    %c0_10 = arith.constant 0 : index
    %11 = vector.load %arg5[%c0_9, %c0_10] : memref<1x128xf32, #tpu.memory_space<vmem>>, vector<1x128xf32>
    %12 = vector.broadcast %11 : vector<1x128xf32> to vector<16x128xf32>
    %13 = arith.addf %10, %12 : vector<16x128xf32>
    %cst_11 = arith.constant 0.000000e+00 : f32
    %14 = vector.broadcast %cst_11 : f32 to vector<16x128xf32>
    %15 = arith.maximumf %13, %14 : vector<16x128xf32>
    %16 = arith.truncf %15 : vector<16x128xf32> to vector<16x128xbf16>
    %c0_12 = arith.constant 0 : index
    %c0_13 = arith.constant 0 : index
    %17 = vector.load %arg6[%c0_12, %c0_13] : memref<128x128xbf16, #tpu.memory_space<vmem>>, vector<128x128xbf16>
    %cst_14 = arith.constant dense<0.000000e+00> : vector<16x128xf32>
    %18 = tpu.matmul %16, %17, %cst_14 {dimension_numbers = #tpu.dot_dimension_numbers<[1], [0], [0], [1], [0, 0, 1, 1], [], []>} : vector<16x128xbf16>, vector<128x128xbf16>, vector<16x128xf32> -> vector<16x128xf32>
    %c0_15 = arith.constant 0 : index
    %c0_16 = arith.constant 0 : index
    %19 = vector.load %arg7[%c0_15, %c0_16] : memref<1x128xf32, #tpu.memory_space<vmem>>, vector<1x128xf32>
    %20 = vector.broadcast %19 : vector<1x128xf32> to vector<16x128xf32>
    %21 = arith.addf %18, %20 : vector<16x128xf32>
    %c0_17 = arith.constant 0 : index
    %c0_18 = arith.constant 0 : index
    %22 = vector.load %arg8[%c0_17, %c0_18] : memref<16x128xf32, #tpu.memory_space<vmem>>, vector<16x128xf32>
    tpu.vector_store %arg8[%c0_17, %c0_18], %21 {strides = array<i32>} : memref<16x128xf32, #tpu.memory_space<vmem>>, vector<16x128xf32>,
    return
  }
  func.func @transform_0(%arg0: i32) -> (i32, i32) {
    %c0_i32 = arith.constant 0 : i32
    %c0_i32_0 = arith.constant 0 : i32
    return %arg0, %c0_i32 : i32, i32
  }
  func.func @transform_1(%arg0: i32) -> (i32, i32) {
    %c0_i32 = arith.constant 0 : i32
    %c0_i32_0 = arith.constant 0 : i32
    %c0_i32_1 = arith.constant 0 : i32
    return %c0_i32, %c0_i32_0 : i32, i32
  }
  func.func @transform_2(%arg0: i32) -> (i32, i32) {
    %c0_i32 = arith.constant 0 : i32
    %c0_i32_0 = arith.constant 0 : i32
    %c0_i32_1 = arith.constant 0 : i32
    return %c0_i32, %c0_i32_0 : i32, i32
  }
  func.func @transform_3(%arg0: i32) -> (i32, i32) {
    %c0_i32 = arith.constant 0 : i32
    %c0_i32_0 = arith.constant 0 : i32
    %c0_i32_1 = arith.constant 0 : i32
    return %c0_i32, %c0_i32_0 : i32, i32
  }
  func.func @transform_4(%arg0: i32) -> (i32, i32) {
    %c0_i32 = arith.constant 0 : i32
    %c0_i32_0 = arith.constant 0 : i32
    %c0_i32_1 = arith.constant 0 : i32
    return %c0_i32, %c0_i32_0 : i32, i32
  }
  func.func @transform_5(%arg0: i32) -> (i32, i32) {
    %c0_i32 = arith.constant 0 : i32
    %c0_i32_0 = arith.constant 0 : i32
    %c0_i32_1 = arith.constant 0 : i32
    return %c0_i32, %c0_i32_0 : i32, i32
  }
  func.func @transform_6(%arg0: i32) -> (i32, i32) {
    %c0_i32 = arith.constant 0 : i32
    %c0_i32_0 = arith.constant 0 : i32
    %c0_i32_1 = arith.constant 0 : i32
    return %c0_i32, %c0_i32_0 : i32, i32
  }
  func.func @transform_7(%arg0: i32) -> (i32, i32) {
    %c0_i32 = arith.constant 0 : i32
    %c0_i32_0 = arith.constant 0 : i32
    return %arg0, %c0_i32 : i32, i32
  }
}

</mosaic_0001>

<llo_original>
// kernel: _fpn_forward_impl.1
$region0: #{_fpn_forward_impl.1}
  #allocation0 [shape = 'u32[]', space=smem, size = 0x4, offset = 0x4, fixed_abs, tag = 'smem constant byte address 0x4 - core index']
  #allocation1 [shape = 'u32[144,128]{1,0:T(1,128)}', space=vmem, size = 0x12000, scoped, tag = 'internal scratch']
  %s0 = inlined_call_operand.vmem [shape: bf16[16,128], index: 0, kind: input, shape index: {}]
  %s1 = inlined_call_operand.hbm [shape: bf16[128,128], index: 1, kind: input, shape index: {}]
  %s2 = inlined_call_operand.vmem [shape: f32[1,128], index: 2, kind: input, shape index: {}]
  %s3 = inlined_call_operand.hbm [shape: bf16[128,128], index: 3, kind: input, shape index: {}]
  %s4 = inlined_call_operand.vmem [shape: f32[1,128], index: 4, kind: input, shape index: {}]
  %s5 = inlined_call_operand.hbm [shape: bf16[128,128], index: 5, kind: input, shape index: {}]
  %s6 = inlined_call_operand.vmem [shape: f32[1,128], index: 6, kind: input, shape index: {}]
  %s7 = inlined_call_operand.hbm [shape: f32[16,128], index: 7, kind: output, shape index: {}]
  %s8 = sld [smem:[#allocation0]]
  $region50: #{_fpn_forward_impl.1} parent=0
    _
  %s10 = ssub.s32 1, %s8
  %s11 = scalar_select 0, %s10, %s8
  $region1: #{_fpn_forward_impl.1} parent=0
    #allocation2 [shape = 'u8[32768]{0}', space=vmem, size = 0x8000, scoped, tag = 'input window, operand 1, single buffered']
    #allocation3 [shape = 's32[1]{0}', space=sflag, size = 0x4, scoped, tag = 'scoped memory for _fpn_forward_impl.1']
    #allocation4 [shape = 's32[1]{0}', space=sflag, size = 0x4, scoped, tag = 'scoped memory for _fpn_forward_impl.1']
    #allocation5 [shape = 'u8[32768]{0}', space=vmem, size = 0x8000, scoped, tag = 'input window, operand 3, single buffered']
    #allocation6 [shape = 's32[1]{0}', space=sflag, size = 0x4, scoped, tag = 'scoped memory for _fpn_forward_impl.1']
    #allocation7 [shape = 'u8[32768]{0}', space=vmem, size = 0x8000, scoped, tag = 'input window, operand 5, single buffered']
    #allocation8 [shape = 'u8[8192]{0}', space=vmem, size = 0x2000, scoped, tag = 'output window, operand 0, single buffered']
    %12 = vsyncpa [#allocation3], 0
    %13 = vsyncpa [#allocation6], 0
    %14 = vsyncpa [#allocation4], 0
    // Predicated region
    $region2: #{_fpn_forward_impl.1} parent=1 // pred_check
      _
    $region3: #{_fpn_forward_impl.1} parent=1 // pred_check_branch
      %16 = sbr.rel (0) target = $region5
    $region4: #{_fpn_forward_impl.1} parent=1 // pred_region
      _
    $region5: #{_fpn_forward_impl.1} parent=1 // pred_fallthru
      _
    // Predicated region
    $region6: #{_fpn_forward_impl.1} parent=1 // pred_check
      _
    $region7: #{_fpn_forward_impl.1} parent=1 // pred_check_branch
      %18 = sbr.rel (0) target = $region9
    $region8: #{_fpn_forward_impl.1} parent=1 // pred_region
      %s20 = ssub.s32 1024, 1024
      %21 = vsyncadd [#allocation3], %s20
      %s22 = sshll.u32 [#allocation2], 4
      %s23 = int_to_ptr.vmem [resolvable:$true] %s22
      %28 = dma.hbm_to_vmem [thread:$0]  %s1, 1024, %s23, [#allocation3], 64, 64, 4
    $region9: #{_fpn_forward_impl.1} parent=1 // pred_fallthru
      _
    // Predicated region
    $region10: #{_fpn_forward_impl.1} parent=1 // pred_check
      _
    $region11: #{_fpn_forward_impl.1} parent=1 // pred_check_branch
      %30 = sbr.rel (0) target = $region13
    $region12: #{_fpn_forward_impl.1} parent=1 // pred_region
      _
    $region13: #{_fpn_forward_impl.1} parent=1 // pred_fallthru
      _
    // Predicated region
    $region14: #{_fpn_forward_impl.1} parent=1 // pred_check
      _
    $region15: #{_fpn_forward_impl.1} parent=1 // pred_check_branch
      %32 = sbr.rel (0) target = $region17
    $region16: #{_fpn_forward_impl.1} parent=1 // pred_region
      %s34 = ssub.s32 1024, 1024
      %35 = vsyncadd [#allocation6], %s34
      %s36 = sshll.u32 [#allocation5], 4
      %s37 = int_to_ptr.vmem [resolvable:$true] %s36
      %42 = dma.hbm_to_vmem [thread:$0]  %s3, 1024, %s37, [#allocation6], 64, 64, 4
    $region17: #{_fpn_forward_impl.1} parent=1 // pred_fallthru
      _
    // Predicated region
    $region18: #{_fpn_forward_impl.1} parent=1 // pred_check
      _
    $region19: #{_fpn_forward_impl.1} parent=1 // pred_check_branch
      %44 = sbr.rel (0) target = $region21
    $region20: #{_fpn_forward_impl.1} parent=1 // pred_region
      _
    $region21: #{_fpn_forward_impl.1} parent=1 // pred_fallthru
      _
    // Predicated region
    $region22: #{_fpn_forward_impl.1} parent=1 // pred_check
      _
    $region23: #{_fpn_forward_impl.1} parent=1 // pred_check_branch
      %46 = sbr.rel (0) target = $region25
    $region24: #{_fpn_forward_impl.1} parent=1 // pred_region
      %s48 = ssub.s32 1024, 1024
      %49 = vsyncadd [#allocation6], %s48
      %s50 = sshll.u32 [#allocation7], 4
      %s51 = int_to_ptr.vmem [resolvable:$true] %s50
      %56 = dma.hbm_to_vmem [thread:$0]  %s5, 1024, %s51, [#allocation6], 64, 64, 4
    $region25: #{_fpn_forward_impl.1} parent=1 // pred_fallthru
      _
    // Predicated region
    $region26: #{_fpn_forward_impl.1} parent=1 // pred_check
      _
    $region27: #{_fpn_forward_impl.1} parent=1 // pred_check_branch
      %58 = sbr.rel (0) target = $region29
    $region28: #{_fpn_forward_impl.1} parent=1 // pred_region
      _
    $region29: #{_fpn_forward_impl.1} parent=1 // pred_fallthru
      _
    // Predicated region
    $region30: #{_fpn_forward_impl.1} parent=1 // pred_check
      _
    $region31: #{_fpn_forward_impl.1} parent=1 // pred_check_branch
      %60 = sbr.rel (0) target = $region33
    $region32: #{_fpn_forward_impl.1} parent=1 // pred_region
      %61 = dma.done [#allocation3], 1024
    $region33: #{_fpn_forward_impl.1} parent=1 // pred_fallthru
      _
    // Predicated region
    $region34: #{_fpn_forward_impl.1} parent=1 // pred_check
      _
    $region35: #{_fpn_forward_impl.1} parent=1 // pred_check_branch
      %63 = sbr.rel (0) target = $region37
    $region36: #{_fpn_forward_impl.1} parent=1 // pred_region
      %64 = dma.done [#allocation6], 1024
    $region37: #{_fpn_forward_impl.1} parent=1 // pred_fallthru
      _
    // Predicated region
    $region38: #{_fpn_forward_impl.1} parent=1 // pred_check
      _
    $region39: #{_fpn_forward_impl.1} parent=1 // pred_check_branch
      %66 = sbr.rel (0) target = $region41
    $region40: #{_fpn_forward_impl.1} parent=1 // pred_region
      %67 = dma.done [#allocation6], 1024
    $region41: #{_fpn_forward_impl.1} parent=1 // pred_fallthru
      _
    %v69 = vld [vmem:[%s0] sm:$0xf]
    %v70 = vld [vmem:[%s0 + $0x4] sm:$0xf]
    %v71 = vld [vmem:[#allocation2] sm:$0xf]
    %v72 = vld [vmem:[#allocation2 + $0x4] sm:$0xf]
    %v73 = vld [vmem:[#allocation2 + $0x8] sm:$0xf]
    %v74 = vld [vmem:[#allocation2 + $0xc] sm:$0xf]
    %v75 = vld [vmem:[#allocation2 + $0x10] sm:$0xf]
    %v76 = vld [vmem:[#allocation2 + $0x14] sm:$0xf]
    %v77 = vld [vmem:[#allocation2 + $0x18] sm:$0xf]
    %v78 = vld [vmem:[#allocation2 + $0x1c] sm:$0xf]
    %v79 = vld [vmem:[#allocation2 + $0x20] sm:$0xf]
    %v80 = vld [vmem:[#allocation2 + $0x24] sm:$0xf]
    %v81 = vld [vmem:[#allocation2 + $0x28] sm:$0xf]
    %v82 = vld [vmem:[#allocation2 + $0x2c] sm:$0xf]
    %v83 = vld [vmem:[#allocation2 + $0x30] sm:$0xf]
    %v84 = vld [vmem:[#allocation2 + $0x34] sm:$0xf]
    %v85 = vld [vmem:[#allocation2 + $0x38] sm:$0xf]
    %v86 = vld [vmem:[#allocation2 + $0x3c] sm:$0xf]
    %v87 = vld [vmem:[%s2] sm:$0x1]
    %v89 = vlaneseq
    %v90 = vshrl.u32 %v89, 7
    %v91 = vsub.s32 0, %v90
    %v92 = vrot.slane %v87, %v91
    %v96 = vunpack.c.l.b16 %v69
    %v97 = vunpack.c.l.b16 %v70
    %v98 = vpack.c.b16 %v97, %v96
    %v116 = vunpack.c.l.b16 %v71
    %v117 = vunpack.c.l.b16 %v72
    %v118 = vunpack.c.l.b16 %v73
    %v119 = vunpack.c.l.b16 %v74
    %v120 = vunpack.c.l.b16 %v75
    %v121 = vunpack.c.l.b16 %v76
    %v122 = vunpack.c.l.b16 %v77
    %v123 = vunpack.c.l.b16 %v78
    %v124 = vunpack.c.l.b16 %v79
    %v125 = vunpack.c.l.b16 %v80
    %v126 = vunpack.c.l.b16 %v81
    %v127 = vunpack.c.l.b16 %v82
    %v128 = vunpack.c.l.b16 %v83
    %v129 = vunpack.c.l.b16 %v84
    %v130 = vunpack.c.l.b16 %v85
    %v131 = vunpack.c.l.b16 %v86
    %v132 = vpack.c.b16 %v117, %v116
    %v133 = vpack.c.b16 %v119, %v118
    %v134 = vpack.c.b16 %v121, %v120
    %v135 = vpack.c.b16 %v123, %v122
    %v136 = vpack.c.b16 %v125, %v124
    %v137 = vpack.c.b16 %v127, %v126
    %v138 = vpack.c.b16 %v129, %v128
    %v139 = vpack.c.b16 %v131, %v130
    %148 = vmatprep.subr.bf16.mxu0 0
    %149 = vmatpush1.bf16.msra.mxu0 %v139
    %150 = vmatprep.subr.bf16.mxu0 0
    %151 = vmatpush1.bf16.msra.mxu0 %v138
    %152 = vmatprep.subr.bf16.mxu0 0
    %153 = vmatpush1.bf16.msra.mxu0 %v137
    %154 = vmatprep.subr.bf16.mxu0 0
    %155 = vmatpush1.bf16.msra.mxu0 %v136
    %156 = vmatprep.subr.bf16.mxu0 0
    %157 = vmatpush1.bf16.msra.mxu0 %v135
    %158 = vmatprep.subr.bf16.mxu0 0
    %159 = vmatpush1.bf16.msra.mxu0 %v134
    %160 = vmatprep.subr.bf16.mxu0 0
    %161 = vmatpush1.bf16.msra.mxu0 %v133
    %162 = vmatprep.subr.bf16.mxu0 0
    %163 = vmatpush1.bf16.msra.mxu0 %v132
    %164 = vmatprep.subr.bf16.mxu0 0
    %165 = vmatpush2.bf16.msra.mxu0 0
    %166 = vmatprep.subr.bf16.mxu0 0
    %167 = vmatpush2.bf16.msra.mxu0 0
    %168 = vmatprep.subr.bf16.mxu0 0
    %169 = vmatpush2.bf16.msra.mxu0 0
    %170 = vmatprep.subr.bf16.mxu0 0
    %171 = vmatpush2.bf16.msra.mxu0 0
    %172 = vmatprep.subr.bf16.mxu0 0
    %173 = vmatpush2.bf16.msra.mxu0 0
    %174 = vmatprep.subr.bf16.mxu0 0
    %175 = vmatpush2.bf16.msra.mxu0 0
    %176 = vmatprep.subr.bf16.mxu0 0
    %177 = vmatpush2.bf16.msra.mxu0 0
    %178 = vmatprep.subr.bf16.mxu0 0
    %179 = vmatpush2.bf16.msra.mxu0 0
    %180 = vmatprep.mubr.bf16.mxu0 0
    %181 = vmatmul.mubr.bf16.gmra.mxu0 %v98
    %v182 = vpop.f32.mrf.mxu0
    %v183 = vadd.f32 %v92, %v182
    %v184 = vpop.f32.mrf.mxu0
    %v185 = vpop.f32.mrf.mxu0
    %v186 = vadd.f32 %v92, %v185
    %v187 = vpop.f32.mrf.mxu0
    %188 = vdwg.mxu0
    %v189 = vmax.f32 %v183, 0.0
    %v190 = vmax.f32 %v186, 0.0
    %v191 = vpack.c.bf16 %v190, %v189
    %v192 = vld [vmem:[#allocation5] sm:$0xf]
    %v193 = vld [vmem:[#allocation5 + $0x4] sm:$0xf]
    %v194 = vld [vmem:[#allocation5 + $0x8] sm:$0xf]
    %v195 = vld [vmem:[#allocation5 + $0xc] sm:$0xf]
    %v196 = vld [vmem:[#allocation5 + $0x10] sm:$0xf]
    %v197 = vld [vmem:[#allocation5 + $0x14] sm:$0xf]
    %v198 = vld [vmem:[#allocation5 + $0x18] sm:$0xf]
    %v199 = vld [vmem:[#allocation5 + $0x1c] sm:$0xf]
    %v200 = vld [vmem:[#allocation5 + $0x20] sm:$0xf]
    %v201 = vld [vmem:[#allocation5 + $0x24] sm:$0xf]
    %v202 = vld [vmem:[#allocation5 + $0x28] sm:$0xf]
    %v203 = vld [vmem:[#allocation5 + $0x2c] sm:$0xf]
    %v204 = vld [vmem:[#allocation5 + $0x30] sm:$0xf]
    %v205 = vld [vmem:[#allocation5 + $0x34] sm:$0xf]
    %v206 = vld [vmem:[#allocation5 + $0x38] sm:$0xf]
    %v207 = vld [vmem:[#allocation5 + $0x3c] sm:$0xf]
    %v208 = vld [vmem:[%s4] sm:$0x1]
    %v210 = vlaneseq
    %v211 = vshrl.u32 %v210, 7
    %v212 = vsub.s32 0, %v211
    %v213 = vrot.slane %v208, %v212
    %v231 = vunpack.c.l.b16 %v192
    %v232 = vunpack.c.l.b16 %v193
    %v233 = vunpack.c.l.b16 %v194
    %v234 = vunpack.c.l.b16 %v195
    %v235 = vunpack.c.l.b16 %v196
    %v236 = vunpack.c.l.b16 %v197
    %v237 = vunpack.c.l.b16 %v198
    %v238 = vunpack.c.l.b16 %v199
    %v239 = vunpack.c.l.b16 %v200
    %v240 = vunpack.c.l.b16 %v201
    %v241 = vunpack.c.l.b16 %v202
    %v242 = vunpack.c.l.b16 %v203
    %v243 = vunpack.c.l.b16 %v204
    %v244 = vunpack.c.l.b16 %v205
    %v245 = vunpack.c.l.b16 %v206
    %v246 = vunpack.c.l.b16 %v207
    %v247 = vpack.c.b16 %v232, %v231
    %v248 = vpack.c.b16 %v234, %v233
    %v249 = vpack.c.b16 %v236, %v235
    %v250 = vpack.c.b16 %v238, %v237
    %v251 = vpack.c.b16 %v240, %v239
    %v252 = vpack.c.b16 %v242, %v241
    %v253 = vpack.c.b16 %v244, %v243
    %v254 = vpack.c.b16 %v246, %v245
    %263 = vmatprep.subr.bf16.mxu0 0
    %264 = vmatpush1.bf16.msra.mxu0 %v254
    %265 = vmatprep.subr.bf16.mxu0 0
    %266 = vmatpush1.bf16.msra.mxu0 %v253
    %267 = vmatprep.subr.bf16.mxu0 0
    %268 = vmatpush1.bf16.msra.mxu0 %v252
    %269 = vmatprep.subr.bf16.mxu0 0
    %270 = vmatpush1.bf16.msra.mxu0 %v251
    %271 = vmatprep.subr.bf16.mxu0 0
    %272 = vmatpush1.bf16.msra.mxu0 %v250
    %273 = vmatprep.subr.bf16.mxu0 0
    %274 = vmatpush1.bf16.msra.mxu0 %v249
    %275 = vmatprep.subr.bf16.mxu0 0
    %276 = vmatpush1.bf16.msra.mxu0 %v248
    %277 = vmatprep.subr.bf16.mxu0 0
    %278 = vmatpush1.bf16.msra.mxu0 %v247
    %279 = vmatprep.subr.bf16.mxu0 0
    %280 = vmatpush2.bf16.msra.mxu0 0
    %281 = vmatprep.subr.bf16.mxu0 0
    %282 = vmatpush2.bf16.msra.mxu0 0
    %283 = vmatprep.subr.bf16.mxu0 0
    %284 = vmatpush2.bf16.msra.mxu0 0
    %285 = vmatprep.subr.bf16.mxu0 0
    %286 = vmatpush2.bf16.msra.mxu0 0
    %287 = vmatprep.subr.bf16.mxu0 0
    %288 = vmatpush2.bf16.msra.mxu0 0
    %289 = vmatprep.subr.bf16.mxu0 0
    %290 = vmatpush2.bf16.msra.mxu0 0
    %291 = vmatprep.subr.bf16.mxu0 0
    %292 = vmatpush2.bf16.msra.mxu0 0
    %293 = vmatprep.subr.bf16.mxu0 0
    %294 = vmatpush2.bf16.msra.mxu0 0
    %295 = vmatprep.mubr.bf16.mxu0 0
    %296 = vmatmul.mubr.bf16.gmra.mxu0 %v191
    %v297 = vpop.f32.mrf.mxu0
    %v298 = vadd.f32 %v213, %v297
    %v299 = vpop.f32.mrf.mxu0
    %v300 = vpop.f32.mrf.mxu0
    %v301 = vadd.f32 %v213, %v300
    %v302 = vpop.f32.mrf.mxu0
    %303 = vdwg.mxu0
    %v304 = vmax.f32 %v298, 0.0
    %v305 = vmax.f32 %v301, 0.0
    %v306 = vpack.c.bf16 %v305, %v304
    %v307 = vld [vmem:[#allocation7] sm:$0xf]
    %v308 = vld [vmem:[#allocation7 + $0x4] sm:$0xf]
    %v309 = vld [vmem:[#allocation7 + $0x8] sm:$0xf]
    %v310 = vld [vmem:[#allocation7 + $0xc] sm:$0xf]
    %v311 = vld [vmem:[#allocation7 + $0x10] sm:$0xf]
    %v312 = vld [vmem:[#allocation7 + $0x14] sm:$0xf]
    %v313 = vld [vmem:[#allocation7 + $0x18] sm:$0xf]
    %v314 = vld [vmem:[#allocation7 + $0x1c] sm:$0xf]
    %v315 = vld [vmem:[#allocation7 + $0x20] sm:$0xf]
    %v316 = vld [vmem:[#allocation7 + $0x24] sm:$0xf]
    %v317 = vld [vmem:[#allocation7 + $0x28] sm:$0xf]
    %v318 = vld [vmem:[#allocation7 + $0x2c] sm:$0xf]
    %v319 = vld [vmem:[#allocation7 + $0x30] sm:$0xf]
    %v320 = vld [vmem:[#allocation7 + $0x34] sm:$0xf]
    %v321 = vld [vmem:[#allocation7 + $0x38] sm:$0xf]
    %v322 = vld [vmem:[#allocation7 + $0x3c] sm:$0xf]
    %v323 = vld [vmem:[%s6] sm:$0x1]
    %v325 = vlaneseq
    %v326 = vshrl.u32 %v325, 7
    %v327 = vsub.s32 0, %v326
    %v328 = vrot.slane %v323, %v327
    %v346 = vunpack.c.l.b16 %v307
    %v347 = vunpack.c.l.b16 %v308
    %v348 = vunpack.c.l.b16 %v309
    %v349 = vunpack.c.l.b16 %v310
    %v350 = vunpack.c.l.b16 %v311
    %v351 = vunpack.c.l.b16 %v312
    %v352 = vunpack.c.l.b16 %v313
    %v353 = vunpack.c.l.b16 %v314
    %v354 = vunpack.c.l.b16 %v315
    %v355 = vunpack.c.l.b16 %v316
    %v356 = vunpack.c.l.b16 %v317
    %v357 = vunpack.c.l.b16 %v318
    %v358 = vunpack.c.l.b16 %v319
    %v359 = vunpack.c.l.b16 %v320
    %v360 = vunpack.c.l.b16 %v321
    %v361 = vunpack.c.l.b16 %v322
    %v362 = vpack.c.b16 %v347, %v346
    %v363 = vpack.c.b16 %v349, %v348
    %v364 = vpack.c.b16 %v351, %v350
    %v365 = vpack.c.b16 %v353, %v352
    %v366 = vpack.c.b16 %v355, %v354
    %v367 = vpack.c.b16 %v357, %v356
    %v368 = vpack.c.b16 %v359, %v358
    %v369 = vpack.c.b16 %v361, %v360
    %378 = vmatprep.subr.bf16.mxu0 0
    %379 = vmatpush1.bf16.msra.mxu0 %v369
    %380 = vmatprep.subr.bf16.mxu0 0
    %381 = vmatpush1.bf16.msra.mxu0 %v368
    %382 = vmatprep.subr.bf16.mxu0 0
    %383 = vmatpush1.bf16.msra.mxu0 %v367
    %384 = vmatprep.subr.bf16.mxu0 0
    %385 = vmatpush1.bf16.msra.mxu0 %v366
    %386 = vmatprep.subr.bf16.mxu0 0
    %387 = vmatpush1.bf16.msra.mxu0 %v365
    %388 = vmatprep.subr.bf16.mxu0 0
    %389 = vmatpush1.bf16.msra.mxu0 %v364
    %390 = vmatprep.subr.bf16.mxu0 0
    %391 = vmatpush1.bf16.msra.mxu0 %v363
    %392 = vmatprep.subr.bf16.mxu0 0
    %393 = vmatpush1.bf16.msra.mxu0 %v362
    %394 = vmatprep.subr.bf16.mxu0 0
    %395 = vmatpush2.bf16.msra.mxu0 0
    %396 = vmatprep.subr.bf16.mxu0 0
    %397 = vmatpush2.bf16.msra.mxu0 0
    %398 = vmatprep.subr.bf16.mxu0 0
    %399 = vmatpush2.bf16.msra.mxu0 0
    %400 = vmatprep.subr.bf16.mxu0 0
    %401 = vmatpush2.bf16.msra.mxu0 0
    %402 = vmatprep.subr.bf16.mxu0 0
    %403 = vmatpush2.bf16.msra.mxu0 0
    %404 = vmatprep.subr.bf16.mxu0 0
    %405 = vmatpush2.bf16.msra.mxu0 0
    %406 = vmatprep.subr.bf16.mxu0 0
    %407 = vmatpush2.bf16.msra.mxu0 0
    %408 = vmatprep.subr.bf16.mxu0 0
    %409 = vmatpush2.bf16.msra.mxu0 0
    %410 = vmatprep.mubr.bf16.mxu0 0
    %411 = vmatmul.mubr.bf16.gmra.mxu0 %v306
    %v412 = vpop.f32.mrf.mxu0
    %v413 = vadd.f32 %v328, %v412
    %v414 = vpop.f32.mrf.mxu0
    %v415 = vpop.f32.mrf.mxu0
    %v416 = vadd.f32 %v328, %v415
    %v417 = vpop.f32.mrf.mxu0
    %418 = vdwg.mxu0
    %419 = vst [vmem:[#allocation8] sm:$0xff] %v413
    %420 = vst [vmem:[#allocation8 + $0x8] sm:$0xff] %v416
    // Predicated region
    $region42: #{_fpn_forward_impl.1} parent=1 // pred_check
      _
    $region43: #{_fpn_forward_impl.1} parent=1 // pred_check_branch
      %422 = sbr.rel (0) target = $region45
    $region44: #{_fpn_forward_impl.1} parent=1 // pred_region
      %s424 = ssub.s32 256, 256
      %425 = vsyncadd [#allocation4], %s424
      %s426 = sshll.u32 [#allocation8], 4
      %s427 = int_to_ptr.vmem [resolvable:$true] %s426
      %432 = dma.vmem_to_hbm [thread:$0]  %s427, 256, %s7, [#allocation4], 128, 128, 8
    $region45: #{_fpn_forward_impl.1} parent=1 // pred_fallthru
      _
    // Predicated region
    $region46: #{_fpn_forward_impl.1} parent=1 // pred_check
      _
    $region47: #{_fpn_forward_impl.1} parent=1 // pred_check_branch
      %434 = sbr.rel (0) target = $region49
    $region48: #{_fpn_forward_impl.1} parent=1 // pred_region
      %435 = dma.done [#allocation4], 256
    $region49: #{_fpn_forward_impl.1} parent=1 // pred_fallthru
      _
    %436 = vsyncpa [#allocation3], 1
    %437 = vsyncpa [#allocation6], 1
    %438 = vsyncpa [#allocation4], 1

</llo_original>
